<compile_context>
chip_gen: v5e
topology: v5e:2x2
jax: 0.10.0
libtpu: 0.0.40
codegen_flags: <defaults>
</compile_context>

<pallas_src>
import jax
import jax.numpy as jnp
from jax.experimental import pallas as pl
from jax.experimental.pallas import tpu as pltpu

C_Z = 128
N_MULT = 4
HIDDEN = N_MULT * C_Z
LN_EPS = 1e-5


def _round_up(x, m):
    return ((x + m - 1) // m) * m


def pair_translation_kernel(x_ref, w1_ref, b1_ref, w2_ref, b2_ref, o_ref):
    # x_ref: (tm, C_Z) tile of flattened pair rows.
    x = x_ref[...].astype(jnp.float32)

    # --- LayerNorm (biased variance, eps=1e-5) in f32.  gamma/beta are folded
    # into w1/b1 by the wrapper, so only the normalization happens here. ---
    mean = jnp.mean(x, axis=-1, keepdims=True)
    xc = x - mean
    var = jnp.mean(xc * xc, axis=-1, keepdims=True)
    xn = xc * jax.lax.rsqrt(var + LN_EPS)

    # --- Linear1 (bf16 MXU operands, f32 accumulation) + bias + ReLU.
    # Downcast of the big (tm, HIDDEN) intermediate is fused into the epilogue.
    h = jnp.dot(xn.astype(w1_ref.dtype), w1_ref[...],
                preferred_element_type=jnp.float32)
    h = jnp.maximum(h + b1_ref[...], 0.0).astype(w2_ref.dtype)

    # --- Linear2 (bf16 MXU operands, f32 accumulation) + bias ---
    y = jnp.dot(h, w2_ref[...], preferred_element_type=jnp.float32)
    o_ref[...] = (y + b2_ref[...]).astype(o_ref.dtype)


def pair_translation(pair, gamma, beta, w1, b1, w2, b2, *, tm=2048,
                     matmul_dtype=jnp.bfloat16):
    """pair: (N, N, C_Z).  Weights follow y = x @ W + b, i.e. W is the
    transpose of PyTorch's (out, in) Linear weight.  Passing `pair` as bf16
    halves activation HBM traffic (the kernel upcasts to f32 for LN)."""
    n1, n2, cz = pair.shape
    assert cz == C_Z
    rows = n1 * n2

    # Effective row tile.  Multiple of 16 (covers f32 and bf16 sublane tiling),
    # multiple of 128 when large; capped so mid/large inputs produce >= 2 grid
    # steps (v7x megacore gets both TensorCores busy).
    tm_eff = min(tm, _round_up(rows, 16))
    if rows >= 256:
        tm_eff = min(tm_eff, max(128, _round_up(pl.cdiv(rows, 2), 128)))
    align = 128 if tm_eff >= 128 else 16
    tm_eff = max(align, (tm_eff // align) * align)

    x2d = pair.reshape(rows, C_Z)

    # --- Constant prep (wrapper-side, once) ---
    # Fold LayerNorm affine into Linear1 (exact, in f32, before bf16 cast):
    #   W1' = diag(gamma) @ W1 ,  b1' = beta @ W1 + b1
    w1_f32 = w1.astype(jnp.float32)
    w1_fold = w1_f32 * gamma.astype(jnp.float32)[:, None]
    b1_fold = (beta.astype(jnp.float32) @ w1_f32) + b1.astype(jnp.float32)

    w1_m = w1_fold.astype(matmul_dtype)
    w2_m = w2.astype(matmul_dtype)
    b1_2d = b1_fold.reshape(1, HIDDEN)
    b2_2d = b2.reshape(1, C_Z).astype(jnp.float32)

    out = pl.pallas_call(
        pair_translation_kernel,
        out_shape=jax.ShapeDtypeStruct((rows, C_Z), pair.dtype),
        grid_spec=pltpu.PrefetchScalarGridSpec(
            num_scalar_prefetch=0,
            grid=(pl.cdiv(rows, tm_eff),),
            in_specs=[
                pl.BlockSpec((tm_eff, C_Z), lambda i: (i, 0)),   # x tile
                pl.BlockSpec((C_Z, HIDDEN), lambda i: (0, 0)),   # w1 (folded)
                pl.BlockSpec((1, HIDDEN), lambda i: (0, 0)),     # b1 (folded)
                pl.BlockSpec((HIDDEN, C_Z), lambda i: (0, 0)),   # w2
                pl.BlockSpec((1, C_Z), lambda i: (0, 0)),        # b2
            ],
            out_specs=pl.BlockSpec((tm_eff, C_Z), lambda i: (i, 0)),
        ),
        compiler_params=pltpu.CompilerParams(
            dimension_semantics=("parallel",),
            vmem_limit_bytes=48 << 20),
    )(x2d, w1_m, b1_2d, w2_m, b2_2d)

    return out.reshape(n1, n2, C_Z)


def reference_jax(pair, gamma, beta, w1, b1, w2, b2):
    x = pair.astype(jnp.float32)
    mean = jnp.mean(x, axis=-1, keepdims=True)
    var = jnp.mean((x - mean) ** 2, axis=-1, keepdims=True)
    xn = (x - mean) / jnp.sqrt(var + LN_EPS) * gamma + beta
    h = jnp.maximum(xn @ w1 + b1, 0.0)
    return h @ w2 + b2


if __name__ == "__main__":
    key = jax.random.PRNGKey(0)
    k_pair, k_g, k_b, k_w1, k_b1, k_w2, k_b2 = jax.random.split(key, 7)

    # Small residue grid; feature dim fixed at c_z = 128 by the module.
    N_RES = 8
    pair = jax.random.normal(k_pair, (N_RES, N_RES, C_Z), dtype=jnp.float32)

    # Deterministic synthetic parameters (LayerNorm + two Linear layers).
    gamma = 1.0 + 0.01 * jax.random.normal(k_g, (C_Z,), dtype=jnp.float32)
    beta = 0.01 * jax.random.normal(k_b, (C_Z,), dtype=jnp.float32)
    # PyTorch Linear stores (out, in); we keep the transposed (in, out) form.
    w1 = 0.02 * jax.random.normal(k_w1, (C_Z, HIDDEN), dtype=jnp.float32)
    b1 = 0.01 * jax.random.normal(k_b1, (HIDDEN,), dtype=jnp.float32)
    w2 = 0.02 * jax.random.normal(k_w2, (HIDDEN, C_Z), dtype=jnp.float32)
    b2 = 0.01 * jax.random.normal(k_b2, (C_Z,), dtype=jnp.float32)

    ref = reference_jax(pair, gamma, beta, w1, b1, w2, b2)

    # 1) Default path: bf16 MXU operands, f32 accumulation.
    out = pair_translation(pair, gamma, beta, w1, b1, w2, b2)
    out = jax.block_until_ready(out)
    assert out.shape == (N_RES, N_RES, C_Z)
    assert jnp.allclose(out, ref, atol=2e-2, rtol=2e-2)

    # 2) Exact-path sanity check: f32 matmuls must match the reference tightly.
    out_f32 = pair_translation(pair, gamma, beta, w1, b1, w2, b2,
                               matmul_dtype=jnp.float32)
    out_f32 = jax.block_until_ready(out_f32)
    assert jnp.allclose(out_f32, ref, atol=2e-4, rtol=2e-4)

    # 3) bf16 activation streaming (halves activation HBM traffic on v6e).
    out_bf16 = pair_translation(pair.astype(jnp.bfloat16), gamma, beta,
                                w1, b1, w2, b2)
    out_bf16 = jax.block_until_ready(out_bf16)
    assert jnp.allclose(out_bf16.astype(jnp.float32), ref, atol=5e-2, rtol=5e-2)

    # 4) Partial-tile path: rows (=144) not a multiple of the forced tile
    #    (tm=128) -> masked final block, no wrapper pad/slice.
    N2 = 12
    pair2 = jax.random.normal(k_pair, (N2, N2, C_Z), dtype=jnp.float32)
    ref2 = reference_jax(pair2, gamma, beta, w1, b1, w2, b2)
    out2 = pair_translation(pair2, gamma, beta, w1, b1, w2, b2, tm=128)
    out2 = jax.block_until_ready(out2)
    assert out2.shape == (N2, N2, C_Z)
    assert jnp.allclose(out2, ref2, atol=2e-2, rtol=2e-2)

    print("KERNEL_OK")
</pallas_src>

<mosaic_0001>
module attributes {stable_mosaic.version = 11 : i64} {
  func.func @pair_translation_kernel(%arg0: i32, %arg1: memref<64x128xf32, #tpu.memory_space<vmem>>, %arg2: memref<128x512xbf16, #tpu.memory_space<vmem>>, %arg3: memref<1x512xf32, #tpu.memory_space<vmem>>, %arg4: memref<512x128xbf16, #tpu.memory_space<vmem>>, %arg5: memref<1x128xf32, #tpu.memory_space<vmem>>, %arg6: memref<64x128xf32, #tpu.memory_space<vmem>>) attributes {dimension_semantics = [#tpu.dimension_semantics<parallel>], iteration_bounds = array<i64: 1>, scalar_prefetch = 0 : i64, scratch_operands = 0 : i64, tpu.core_type = #tpu.core_type<tc>, window_params = [{transform_indices = @transform_0, window_bounds = array<i64: 64, 128>}, {pipeline_mode = #tpu.pipeline_mode<synchronous>, transform_indices = @transform_1, window_bounds = array<i64: 128, 512>}, {pipeline_mode = #tpu.pipeline_mode<synchronous>, transform_indices = @transform_2, window_bounds = array<i64: 1, 512>}, {pipeline_mode = #tpu.pipeline_mode<synchronous>, transform_indices = @transform_3, window_bounds = array<i64: 512, 128>}, {pipeline_mode = #tpu.pipeline_mode<synchronous>, transform_indices = @transform_4, window_bounds = array<i64: 1, 128>}, {transform_indices = @transform_5, window_bounds = array<i64: 64, 128>}]} {
    %c0 = arith.constant 0 : index
    %c0_0 = arith.constant 0 : index
    %0 = vector.load %arg1[%c0, %c0_0] : memref<64x128xf32, #tpu.memory_space<vmem>>, vector<64x128xf32>
    %cst = arith.constant dense<0.000000e+00> : vector<64xf32>
    %1 = vector.multi_reduction <add>, %0, %cst [1] : vector<64x128xf32> to vector<64xf32>
    %2 = vector.shape_cast %1 : vector<64xf32> to vector<64x1xf32>
    %cst_1 = arith.constant 1.280000e+02 : f32
    %3 = vector.broadcast %cst_1 : f32 to vector<64x1xf32>
    %4 = arith.divf %2, %3 : vector<64x1xf32>
    %5 = vector.broadcast %4 : vector<64x1xf32> to vector<64x128xf32>
    %6 = arith.subf %0, %5 : vector<64x128xf32>
    %7 = arith.mulf %6, %6 : vector<64x128xf32>
    %cst_2 = arith.constant dense<0.000000e+00> : vector<64xf32>
    %8 = vector.multi_reduction <add>, %7, %cst_2 [1] : vector<64x128xf32> to vector<64xf32>
    %9 = vector.shape_cast %8 : vector<64xf32> to vector<64x1xf32>
    %cst_3 = arith.constant 1.280000e+02 : f32
    %10 = vector.broadcast %cst_3 : f32 to vector<64x1xf32>
    %11 = arith.divf %9, %10 : vector<64x1xf32>
    %cst_4 = arith.constant 9.99999974E-6 : f32
    %12 = vector.broadcast %cst_4 : f32 to vector<64x1xf32>
    %13 = arith.addf %11, %12 : vector<64x1xf32>
    %14 = math.rsqrt %13 : vector<64x1xf32>
    %15 = vector.broadcast %14 : vector<64x1xf32> to vector<64x128xf32>
    %16 = arith.mulf %6, %15 : vector<64x128xf32>
    %17 = arith.truncf %16 : vector<64x128xf32> to vector<64x128xbf16>
    %c0_5 = arith.constant 0 : index
    %c0_6 = arith.constant 0 : index
    %18 = vector.load %arg2[%c0_5, %c0_6] : memref<128x512xbf16, #tpu.memory_space<vmem>>, vector<128x512xbf16>
    %cst_7 = arith.constant dense<0.000000e+00> : vector<64x512xf32>
    %19 = tpu.matmul %17, %18, %cst_7 {dimension_numbers = #tpu.dot_dimension_numbers<[1], [0], [0], [1], [0, 0, 1, 1], [], []>} : vector<64x128xbf16>, vector<128x512xbf16>, vector<64x512xf32> -> vector<64x512xf32>
    %c0_8 = arith.constant 0 : index
    %c0_9 = arith.constant 0 : index
    %20 = vector.load %arg3[%c0_8, %c0_9] : memref<1x512xf32, #tpu.memory_space<vmem>>, vector<1x512xf32>
    %21 = vector.broadcast %20 : vector<1x512xf32> to vector<64x512xf32>
    %22 = arith.addf %19, %21 : vector<64x512xf32>
    %cst_10 = arith.constant 0.000000e+00 : f32
    %23 = vector.broadcast %cst_10 : f32 to vector<64x512xf32>
    %24 = arith.maximumf %22, %23 : vector<64x512xf32>
    %25 = arith.truncf %24 : vector<64x512xf32> to vector<64x512xbf16>
    %c0_11 = arith.constant 0 : index
    %c0_12 = arith.constant 0 : index
    %26 = vector.load %arg4[%c0_11, %c0_12] : memref<512x128xbf16, #tpu.memory_space<vmem>>, vector<512x128xbf16>
    %cst_13 = arith.constant dense<0.000000e+00> : vector<64x128xf32>
    %27 = tpu.matmul %25, %26, %cst_13 {dimension_numbers = #tpu.dot_dimension_numbers<[1], [0], [0], [1], [0, 0, 1, 1], [], []>} : vector<64x512xbf16>, vector<512x128xbf16>, vector<64x128xf32> -> vector<64x128xf32>
    %c0_14 = arith.constant 0 : index
    %c0_15 = arith.constant 0 : index
    %28 = vector.load %arg5[%c0_14, %c0_15] : memref<1x128xf32, #tpu.memory_space<vmem>>, vector<1x128xf32>
    %29 = vector.broadcast %28 : vector<1x128xf32> to vector<64x128xf32>
    %30 = arith.addf %27, %29 : vector<64x128xf32>
    %c0_16 = arith.constant 0 : index
    %c0_17 = arith.constant 0 : index
    %31 = vector.load %arg6[%c0_16, %c0_17] : memref<64x128xf32, #tpu.memory_space<vmem>>, vector<64x128xf32>
    tpu.vector_store %arg6[%c0_16, %c0_17], %30 {strides = array<i32>} : memref<64x128xf32, #tpu.memory_space<vmem>>, vector<64x128xf32>,
    return
  }
  func.func @transform_0(%arg0: i32) -> (i32, i32) {
    %c0_i32 = arith.constant 0 : i32
    %c0_i32_0 = arith.constant 0 : i32
    return %arg0, %c0_i32 : i32, i32
  }
  func.func @transform_1(%arg0: i32) -> (i32, i32) {
    %c0_i32 = arith.constant 0 : i32
    %c0_i32_0 = arith.constant 0 : i32
    %c0_i32_1 = arith.constant 0 : i32
    return %c0_i32, %c0_i32_0 : i32, i32
  }
  func.func @transform_2(%arg0: i32) -> (i32, i32) {
    %c0_i32 = arith.constant 0 : i32
    %c0_i32_0 = arith.constant 0 : i32
    %c0_i32_1 = arith.constant 0 : i32
    return %c0_i32, %c0_i32_0 : i32, i32
  }
  func.func @transform_3(%arg0: i32) -> (i32, i32) {
    %c0_i32 = arith.constant 0 : i32
    %c0_i32_0 = arith.constant 0 : i32
    %c0_i32_1 = arith.constant 0 : i32
    return %c0_i32, %c0_i32_0 : i32, i32
  }
  func.func @transform_4(%arg0: i32) -> (i32, i32) {
    %c0_i32 = arith.constant 0 : i32
    %c0_i32_0 = arith.constant 0 : i32
    %c0_i32_1 = arith.constant 0 : i32
    return %c0_i32, %c0_i32_0 : i32, i32
  }
  func.func @transform_5(%arg0: i32) -> (i32, i32) {
    %c0_i32 = arith.constant 0 : i32
    %c0_i32_0 = arith.constant 0 : i32
    return %arg0, %c0_i32 : i32, i32
  }
}

</mosaic_0001>

<llo_original>
// kernel: tpu_custom_call.1
$region0: #{tpu_custom_call.1}
  #allocation0 [shape = 'u32[]', space=smem, size = 0x4, offset = 0x4, fixed_abs, tag = 'smem constant byte address 0x4 - core index']
  #allocation1 [shape = 'u32[72,128]{1,0:T(1,128)}', space=vmem, size = 0x9000, scoped, tag = 'internal scratch']
  %s0 = inlined_call_operand.hbm [shape: f32[64,128], index: 0, kind: input, shape index: {}]
  %s1 = inlined_call_operand.hbm [shape: bf16[128,512], index: 1, kind: input, shape index: {}]
  %s2 = inlined_call_operand.hbm [shape: f32[1,512], index: 2, kind: input, shape index: {}]
  %s3 = inlined_call_operand.hbm [shape: bf16[512,128], index: 3, kind: input, shape index: {}]
  %s4 = inlined_call_operand.vmem [shape: f32[1,128], index: 4, kind: input, shape index: {}]
  %s5 = inlined_call_operand.hbm [shape: f32[64,128], index: 5, kind: output, shape index: {}]
  %s6 = sld [smem:[#allocation0]]
  $region46: #{tpu_custom_call.1} parent=0
    _
  %s8 = ssub.s32 1, %s6
  %s9 = scalar_select 0, %s8, %s6
  $region1: #{tpu_custom_call.1} parent=0
    #allocation2 [shape = 'u8[32768]{0}', space=vmem, size = 0x8000, scoped, tag = 'input window, operand 0, single buffered']
    #allocation3 [shape = 's32[1]{0}', space=sflag, size = 0x4, scoped, tag = 'scoped memory for tpu_custom_call.1']
    #allocation4 [shape = 's32[1]{0}', space=sflag, size = 0x4, scoped, tag = 'scoped memory for tpu_custom_call.1']
    #allocation5 [shape = 'u8[131072]{0}', space=vmem, size = 0x20000, scoped, tag = 'input window, operand 1, single buffered']
    #allocation6 [shape = 's32[1]{0}', space=sflag, size = 0x4, scoped, tag = 'scoped memory for tpu_custom_call.1']
    #allocation7 [shape = 'u8[2048]{0}', space=vmem, size = 0x800, scoped, tag = 'input window, operand 2, single buffered']
    #allocation8 [shape = 'u8[131072]{0}', space=vmem, size = 0x20000, scoped, tag = 'input window, operand 3, single buffered']
    #allocation9 [shape = 's32[1]{0}', space=sflag, size = 0x4, scoped, tag = 'scoped memory for tpu_custom_call.1']
    #allocation10 [shape = 'u8[32768]{0}', space=vmem, size = 0x8000, scoped, tag = 'output window, operand 0, single buffered']
    %10 = vsyncpa [#allocation3], 0
    %11 = vsyncpa [#allocation6], 0
    %12 = vsyncpa [#allocation9], 0
    %13 = vsyncpa [#allocation4], 0
    // Predicated region
    $region2: #{tpu_custom_call.1} parent=1 // pred_check
      _
    $region3: #{tpu_custom_call.1} parent=1 // pred_check_branch
      %15 = sbr.rel (0) target = $region5
    $region4: #{tpu_custom_call.1} parent=1 // pred_region
      %17 = vsyncadd [#allocation3], 0
      %s18 = sshll.u32 %s0, 4
      %s19 = int_to_ptr.hbm [resolvable:$true] %s18
      %s20 = sshll.u32 [#allocation2], 4
      %s21 = int_to_ptr.vmem [resolvable:$true] %s20
      %26 = dma.hbm_to_vmem [thread:$0]  %s19, 1024, %s21, [#allocation3], 128, 128, 8
    $region5: #{tpu_custom_call.1} parent=1 // pred_fallthru
      _
    // Predicated region
    $region6: #{tpu_custom_call.1} parent=1 // pred_check
      _
    $region7: #{tpu_custom_call.1} parent=1 // pred_check_branch
      %28 = sbr.rel (0) target = $region9
    $region8: #{tpu_custom_call.1} parent=1 // pred_region
      %30 = vsyncadd [#allocation6], 0
      %s31 = sshll.u32 %s1, 4
      %s32 = int_to_ptr.hbm [resolvable:$true] %s31
      %s33 = sshll.u32 [#allocation5], 4
      %s34 = int_to_ptr.vmem [resolvable:$true] %s33
      %39 = dma.hbm_to_vmem [thread:$0]  %s32, 4096, %s34, [#allocation6], 256, 256, 16
    $region9: #{tpu_custom_call.1} parent=1 // pred_fallthru
      _
    // Predicated region
    $region10: #{tpu_custom_call.1} parent=1 // pred_check
      _
    $region11: #{tpu_custom_call.1} parent=1 // pred_check_branch
      %41 = sbr.rel (0) target = $region13
    $region12: #{tpu_custom_call.1} parent=1 // pred_region
      %43 = vsyncadd [#allocation6], 0
      %s45 = sshll.u32 %s2, 4
      %s46 = int_to_ptr.hbm [resolvable:$true] %s45
      %s47 = sshll.u32 [#allocation7], 4
      %s48 = int_to_ptr.vmem [resolvable:$true] %s47
      %50 = dma.hbm_to_vmem [thread:$0]  %s46, 64, %s48, [#allocation6]
    $region13: #{tpu_custom_call.1} parent=1 // pred_fallthru
      _
    // Predicated region
    $region14: #{tpu_custom_call.1} parent=1 // pred_check
      _
    $region15: #{tpu_custom_call.1} parent=1 // pred_check_branch
      %52 = sbr.rel (0) target = $region17
    $region16: #{tpu_custom_call.1} parent=1 // pred_region
      %54 = vsyncadd [#allocation9], 0
      %s55 = sshll.u32 %s3, 4
      %s56 = int_to_ptr.hbm [resolvable:$true] %s55
      %s57 = sshll.u32 [#allocation8], 4
      %s58 = int_to_ptr.vmem [resolvable:$true] %s57
      %63 = dma.hbm_to_vmem [thread:$0]  %s56, 4096, %s58, [#allocation9], 64, 64, 4
    $region17: #{tpu_custom_call.1} parent=1 // pred_fallthru
      _
    // Predicated region
    $region18: #{tpu_custom_call.1} parent=1 // pred_check
      _
    $region19: #{tpu_custom_call.1} parent=1 // pred_check_branch
      %65 = sbr.rel (0) target = $region21
    $region20: #{tpu_custom_call.1} parent=1 // pred_region
      _
    $region21: #{tpu_custom_call.1} parent=1 // pred_fallthru
      _
    // Predicated region
    $region22: #{tpu_custom_call.1} parent=1 // pred_check
      _
    $region23: #{tpu_custom_call.1} parent=1 // pred_check_branch
      %67 = sbr.rel (0) target = $region25
    $region24: #{tpu_custom_call.1} parent=1 // pred_region
      %69 = dma.done [#allocation3], 1024
    $region25: #{tpu_custom_call.1} parent=1 // pred_fallthru
      _
    // Predicated region
    $region26: #{tpu_custom_call.1} parent=1 // pred_check
      _
    $region27: #{tpu_custom_call.1} parent=1 // pred_check_branch
      %71 = sbr.rel (0) target = $region29
    $region28: #{tpu_custom_call.1} parent=1 // pred_region
      %73 = dma.done [#allocation6], 4096
    $region29: #{tpu_custom_call.1} parent=1 // pred_fallthru
      _
    // Predicated region
    $region30: #{tpu_custom_call.1} parent=1 // pred_check
      _
    $region31: #{tpu_custom_call.1} parent=1 // pred_check_branch
      %75 = sbr.rel (0) target = $region33
    $region32: #{tpu_custom_call.1} parent=1 // pred_region
      %77 = dma.done [#allocation6], 64
    $region33: #{tpu_custom_call.1} parent=1 // pred_fallthru
      _
    // Predicated region
    $region34: #{tpu_custom_call.1} parent=1 // pred_check
      _
    $region35: #{tpu_custom_call.1} parent=1 // pred_check_branch
      %79 = sbr.rel (0) target = $region37
    $region36: #{tpu_custom_call.1} parent=1 // pred_region
      %81 = dma.done [#allocation9], 4096
    $region37: #{tpu_custom_call.1} parent=1 // pred_fallthru
      _
    %v82 = vld [vmem:[#allocation2] sm:$0xff]
    %v83 = vld [vmem:[#allocation2 + $0x8] sm:$0xff]
    %v84 = vld [vmem:[#allocation2 + $0x10] sm:$0xff]
    %v85 = vld [vmem:[#allocation2 + $0x18] sm:$0xff]
    %v86 = vld [vmem:[#allocation2 + $0x20] sm:$0xff]
    %v87 = vld [vmem:[#allocation2 + $0x28] sm:$0xff]
    %v88 = vld [vmem:[#allocation2 + $0x30] sm:$0xff]
    %v89 = vld [vmem:[#allocation2 + $0x38] sm:$0xff]
    %90 = vadd.xlane.f32.xlu0 %v82
    %v91 = vpop.xlane.xlu0 %90
    %92 = vadd.xlane.f32.xlu0 %v83
    %v93 = vpop.xlane.xlu0 %92
    %94 = vadd.xlane.f32.xlu0 %v84
    %v95 = vpop.xlane.xlu0 %94
    %96 = vadd.xlane.f32.xlu0 %v85
    %v97 = vpop.xlane.xlu0 %96
    %98 = vadd.xlane.f32.xlu0 %v86
    %v99 = vpop.xlane.xlu0 %98
    %100 = vadd.xlane.f32.xlu0 %v87
    %v101 = vpop.xlane.xlu0 %100
    %102 = vadd.xlane.f32.xlu0 %v88
    %v103 = vpop.xlane.xlu0 %102
    %104 = vadd.xlane.f32.xlu0 %v89
    %v105 = vpop.xlane.xlu0 %104
    %v106 = vrcp.pop 128.0
    %v107 = vmul.f32 128.0, %v106
    %v108 = vsub.f32 1.0, %v107
    %v109 = vmul.f32 %v106, %v108
    %v110 = vadd.f32 %v106, %v109
    %vm111 = vweird.f32 %v106
    %v112 = vsel %vm111, %v106, %v110
    %v113 = vmul.f32 %v91, %v112
    %v114 = vmul.f32 %v93, %v112
    %v115 = vmul.f32 %v95, %v112
    %v116 = vmul.f32 %v97, %v112
    %v117 = vmul.f32 %v99, %v112
    %v118 = vmul.f32 %v101, %v112
    %v119 = vmul.f32 %v103, %v112
    %v120 = vmul.f32 %v105, %v112
    %v121 = vsub.f32 %v82, %v113
    %v122 = vsub.f32 %v83, %v114
    %v123 = vsub.f32 %v84, %v115
    %v124 = vsub.f32 %v85, %v116
    %v125 = vsub.f32 %v86, %v117
    %v126 = vsub.f32 %v87, %v118
    %v127 = vsub.f32 %v88, %v119
    %v128 = vsub.f32 %v89, %v120
    %v129 = vmul.f32 %v121, %v121
    %v130 = vmul.f32 %v122, %v122
    %v131 = vmul.f32 %v123, %v123
    %v132 = vmul.f32 %v124, %v124
    %v133 = vmul.f32 %v125, %v125
    %v134 = vmul.f32 %v126, %v126
    %v135 = vmul.f32 %v127, %v127
    %v136 = vmul.f32 %v128, %v128
    %137 = vadd.xlane.f32.xlu0 %v129
    %v138 = vpop.xlane.xlu0 %137
    %139 = vadd.xlane.f32.xlu0 %v130
    %v140 = vpop.xlane.xlu0 %139
    %141 = vadd.xlane.f32.xlu0 %v131
    %v142 = vpop.xlane.xlu0 %141
    %143 = vadd.xlane.f32.xlu0 %v132
    %v144 = vpop.xlane.xlu0 %143
    %145 = vadd.xlane.f32.xlu0 %v133
    %v146 = vpop.xlane.xlu0 %145
    %147 = vadd.xlane.f32.xlu0 %v134
    %v148 = vpop.xlane.xlu0 %147
    %149 = vadd.xlane.f32.xlu0 %v135
    %v150 = vpop.xlane.xlu0 %149
    %151 = vadd.xlane.f32.xlu0 %v136
    %v152 = vpop.xlane.xlu0 %151
    %v153 = vmul.f32 %v138, %v112
    %v154 = vmul.f32 %v140, %v112
    %v155 = vmul.f32 %v142, %v112
    %v156 = vmul.f32 %v144, %v112
    %v157 = vmul.f32 %v146, %v112
    %v158 = vmul.f32 %v148, %v112
    %v159 = vmul.f32 %v150, %v112
    %v160 = vmul.f32 %v152, %v112
    %v161 = vadd.f32 %v153, 1e-05
    %v162 = vadd.f32 %v154, 1e-05
    %v163 = vadd.f32 %v155, 1e-05
    %v164 = vadd.f32 %v156, 1e-05
    %v165 = vadd.f32 %v157, 1e-05
    %v166 = vadd.f32 %v158, 1e-05
    %v167 = vadd.f32 %v159, 1e-05
    %v168 = vadd.f32 %v160, 1e-05
    %v169 = vrsqrt.pop %v161
    %v170 = vmul.f32 %v169, %v161
    %v171 = vmul.f32 %v170, %v169
    %v172 = vmul.f32 0.5, %v171
    %v173 = vsub.f32 1.5, %v172
    %v174 = vmul.f32 %v169, %v173
    %vm175 = vweird.f32 %v161
    %vm176 = vweird.f32 %v169
    %vm177 = vmor %vm175, %vm176
    %v178 = vsel %vm177, %v169, %v174
    %v179 = vrsqrt.pop %v162
    %v180 = vmul.f32 %v179, %v162
    %v181 = vmul.f32 %v180, %v179
    %v182 = vmul.f32 0.5, %v181
    %v183 = vsub.f32 1.5, %v182
    %v184 = vmul.f32 %v179, %v183
    %vm185 = vweird.f32 %v162
    %vm186 = vweird.f32 %v179
    %vm187 = vmor %vm185, %vm186
    %v188 = vsel %vm187, %v179, %v184
    %v189 = vrsqrt.pop %v163
    %v190 = vmul.f32 %v189, %v163
    %v191 = vmul.f32 %v190, %v189
    %v192 = vmul.f32 0.5, %v191
    %v193 = vsub.f32 1.5, %v192
    %v194 = vmul.f32 %v189, %v193
    %vm195 = vweird.f32 %v163
    %vm196 = vweird.f32 %v189
    %vm197 = vmor %vm195, %vm196
    %v198 = vsel %vm197, %v189, %v194
    %v199 = vrsqrt.pop %v164
    %v200 = vmul.f32 %v199, %v164
    %v201 = vmul.f32 %v200, %v199
    %v202 = vmul.f32 0.5, %v201
    %v203 = vsub.f32 1.5, %v202
    %v204 = vmul.f32 %v199, %v203
    %vm205 = vweird.f32 %v164
    %vm206 = vweird.f32 %v199
    %vm207 = vmor %vm205, %vm206
    %v208 = vsel %vm207, %v199, %v204
    %v209 = vrsqrt.pop %v165
    %v210 = vmul.f32 %v209, %v165
    %v211 = vmul.f32 %v210, %v209
    %v212 = vmul.f32 0.5, %v211
    %v213 = vsub.f32 1.5, %v212
    %v214 = vmul.f32 %v209, %v213
    %vm215 = vweird.f32 %v165
    %vm216 = vweird.f32 %v209
    %vm217 = vmor %vm215, %vm216
    %v218 = vsel %vm217, %v209, %v214
    %v219 = vrsqrt.pop %v166
    %v220 = vmul.f32 %v219, %v166
    %v221 = vmul.f32 %v220, %v219
    %v222 = vmul.f32 0.5, %v221
    %v223 = vsub.f32 1.5, %v222
    %v224 = vmul.f32 %v219, %v223
    %vm225 = vweird.f32 %v166
    %vm226 = vweird.f32 %v219
    %vm227 = vmor %vm225, %vm226
    %v228 = vsel %vm227, %v219, %v224
    %v229 = vrsqrt.pop %v167
    %v230 = vmul.f32 %v229, %v167
    %v231 = vmul.f32 %v230, %v229
    %v232 = vmul.f32 0.5, %v231
    %v233 = vsub.f32 1.5, %v232
    %v234 = vmul.f32 %v229, %v233
    %vm235 = vweird.f32 %v167
    %vm236 = vweird.f32 %v229
    %vm237 = vmor %vm235, %vm236
    %v238 = vsel %vm237, %v229, %v234
    %v239 = vrsqrt.pop %v168
    %v240 = vmul.f32 %v239, %v168
    %v241 = vmul.f32 %v240, %v239
    %v242 = vmul.f32 0.5, %v241
    %v243 = vsub.f32 1.5, %v242
    %v244 = vmul.f32 %v239, %v243
    %vm245 = vweird.f32 %v168
    %vm246 = vweird.f32 %v239
    %vm247 = vmor %vm245, %vm246
    %v248 = vsel %vm247, %v239, %v244
    %v249 = vmul.f32 %v121, %v178
    %v250 = vmul.f32 %v122, %v188
    %v251 = vmul.f32 %v123, %v198
    %v252 = vmul.f32 %v124, %v208
    %v253 = vmul.f32 %v125, %v218
    %v254 = vmul.f32 %v126, %v228
    %v255 = vmul.f32 %v127, %v238
    %v256 = vmul.f32 %v128, %v248
    %v257 = vpack.c.bf16 %v250, %v249
    %v258 = vpack.c.bf16 %v252, %v251
    %v259 = vpack.c.bf16 %v254, %v253
    %v260 = vpack.c.bf16 %v256, %v255
    %v261 = vld [vmem:[#allocation5] sm:$0xff]
    %v262 = vld [vmem:[#allocation5 + $0x8] sm:$0xff]
    %v263 = vld [vmem:[#allocation5 + $0x10] sm:$0xff]
    %v264 = vld [vmem:[#allocation5 + $0x18] sm:$0xff]
    %v265 = vld [vmem:[#allocation5 + $0x20] sm:$0xff]
    %v266 = vld [vmem:[#allocation5 + $0x28] sm:$0xff]
    %v267 = vld [vmem:[#allocation5 + $0x30] sm:$0xff]
    %v268 = vld [vmem:[#allocation5 + $0x38] sm:$0xff]
    %v269 = vld [vmem:[#allocation5 + $0x40] sm:$0xff]
    %v270 = vld [vmem:[#allocation5 + $0x48] sm:$0xff]
    %v271 = vld [vmem:[#allocation5 + $0x50] sm:$0xff]
    %v272 = vld [vmem:[#allocation5 + $0x58] sm:$0xff]
    %v273 = vld [vmem:[#allocation5 + $0x60] sm:$0xff]
    %v274 = vld [vmem:[#allocation5 + $0x68] sm:$0xff]
    %v275 = vld [vmem:[#allocation5 + $0x70] sm:$0xff]
    %v276 = vld [vmem:[#allocation5 + $0x78] sm:$0xff]
    %v277 = vld [vmem:[#allocation5 + $0x80] sm:$0xff]
    %v278 = vld [vmem:[#allocation5 + $0x88] sm:$0xff]
    %v279 = vld [vmem:[#allocation5 + $0x90] sm:$0xff]
    %v280 = vld [vmem:[#allocation5 + $0x98] sm:$0xff]
    %v281 = vld [vmem:[#allocation5 + $0xa0] sm:$0xff]
    %v282 = vld [vmem:[#allocation5 + $0xa8] sm:$0xff]
    %v283 = vld [vmem:[#allocation5 + $0xb0] sm:$0xff]
    %v284 = vld [vmem:[#allocation5 + $0xb8] sm:$0xff]
    %v285 = vld [vmem:[#allocation5 + $0xc0] sm:$0xff]
    %v286 = vld [vmem:[#allocation5 + $0xc8] sm:$0xff]
    %v287 = vld [vmem:[#allocation5 + $0xd0] sm:$0xff]
    %v288 = vld [vmem:[#allocation5 + $0xd8] sm:$0xff]
    %v289 = vld [vmem:[#allocation5 + $0xe0] sm:$0xff]
    %v290 = vld [vmem:[#allocation5 + $0xe8] sm:$0xff]
    %v291 = vld [vmem:[#allocation5 + $0xf0] sm:$0xff]
    %v292 = vld [vmem:[#allocation5 + $0xf8] sm:$0xff]
    %v293 = vld [vmem:[#allocation7] sm:$0xf]
    %v295 = vperm.slane %v293, 0
    %v296 = vperm.slane %v293, 1
    %v297 = vperm.slane %v293, 2
    %v298 = vperm.slane %v293, 3
    %v335 = vunpack.c.l.b16 %v261
    %v336 = vunpack.c.h.b16 %v261
    %v337 = vunpack.c.l.b16 %v262
    %v338 = vunpack.c.h.b16 %v262
    %v339 = vunpack.c.l.b16 %v263
    %v340 = vunpack.c.h.b16 %v263
    %v341 = vunpack.c.l.b16 %v264
    %v342 = vunpack.c.h.b16 %v264
    %v343 = vunpack.c.l.b16 %v265
    %v344 = vunpack.c.h.b16 %v265
    %v345 = vunpack.c.l.b16 %v266
    %v346 = vunpack.c.h.b16 %v266
    %v347 = vunpack.c.l.b16 %v267
    %v348 = vunpack.c.h.b16 %v267
    %v349 = vunpack.c.l.b16 %v268
    %v350 = vunpack.c.h.b16 %v268
    %v351 = vunpack.c.l.b16 %v269
    %v352 = vunpack.c.h.b16 %v269
    %v353 = vunpack.c.l.b16 %v270
    %v354 = vunpack.c.h.b16 %v270
    %v355 = vunpack.c.l.b16 %v271
    %v356 = vunpack.c.h.b16 %v271
    %v357 = vunpack.c.l.b16 %v272
    %v358 = vunpack.c.h.b16 %v272
    %v359 = vunpack.c.l.b16 %v273
    %v360 = vunpack.c.h.b16 %v273
    %v361 = vunpack.c.l.b16 %v274
    %v362 = vunpack.c.h.b16 %v274
    %v363 = vunpack.c.l.b16 %v275
    %v364 = vunpack.c.h.b16 %v275
    %v365 = vunpack.c.l.b16 %v276
    %v366 = vunpack.c.h.b16 %v276
    %v367 = vunpack.c.l.b16 %v277
    %v368 = vunpack.c.h.b16 %v277
    %v369 = vunpack.c.l.b16 %v278
    %v370 = vunpack.c.h.b16 %v278
    %v371 = vunpack.c.l.b16 %v279
    %v372 = vunpack.c.h.b16 %v279
    %v373 = vunpack.c.l.b16 %v280
    %v374 = vunpack.c.h.b16 %v280
    %v375 = vunpack.c.l.b16 %v281
    %v376 = vunpack.c.h.b16 %v281
    %v377 = vunpack.c.l.b16 %v282
    %v378 = vunpack.c.h.b16 %v282
    %v379 = vunpack.c.l.b16 %v283
    %v380 = vunpack.c.h.b16 %v283
    %v381 = vunpack.c.l.b16 %v284
    %v382 = vunpack.c.h.b16 %v284
    %v383 = vunpack.c.l.b16 %v285
    %v384 = vunpack.c.h.b16 %v285
    %v385 = vunpack.c.l.b16 %v286
    %v386 = vunpack.c.h.b16 %v286
    %v387 = vunpack.c.l.b16 %v287
    %v388 = vunpack.c.h.b16 %v287
    %v389 = vunpack.c.l.b16 %v288
    %v390 = vunpack.c.h.b16 %v288
    %v391 = vunpack.c.l.b16 %v289
    %v392 = vunpack.c.h.b16 %v289
    %v393 = vunpack.c.l.b16 %v290
    %v394 = vunpack.c.h.b16 %v290
    %v395 = vunpack.c.l.b16 %v291
    %v396 = vunpack.c.h.b16 %v291
    %v397 = vunpack.c.l.b16 %v292
    %v398 = vunpack.c.h.b16 %v292
    %v399 = vpack.c.b16 %v339, %v335
    %v400 = vpack.c.b16 %v340, %v336
    %v401 = vpack.c.b16 %v341, %v337
    %v402 = vpack.c.b16 %v342, %v338
    %v403 = vpack.c.b16 %v347, %v343
    %v404 = vpack.c.b16 %v348, %v344
    %v405 = vpack.c.b16 %v349, %v345
    %v406 = vpack.c.b16 %v350, %v346
    %v407 = vpack.c.b16 %v355, %v351
    %v408 = vpack.c.b16 %v356, %v352
    %v409 = vpack.c.b16 %v357, %v353
    %v410 = vpack.c.b16 %v358, %v354
    %v411 = vpack.c.b16 %v363, %v359
    %v412 = vpack.c.b16 %v364, %v360
    %v413 = vpack.c.b16 %v365, %v361
    %v414 = vpack.c.b16 %v366, %v362
    %v415 = vpack.c.b16 %v371, %v367
    %v416 = vpack.c.b16 %v372, %v368
    %v417 = vpack.c.b16 %v373, %v369
    %v418 = vpack.c.b16 %v374, %v370
    %v419 = vpack.c.b16 %v379, %v375
    %v420 = vpack.c.b16 %v380, %v376
    %v421 = vpack.c.b16 %v381, %v377
    %v422 = vpack.c.b16 %v382, %v378
    %v423 = vpack.c.b16 %v387, %v383
    %v424 = vpack.c.b16 %v388, %v384
    %v425 = vpack.c.b16 %v389, %v385
    %v426 = vpack.c.b16 %v390, %v386
    %v427 = vpack.c.b16 %v395, %v391
    %v428 = vpack.c.b16 %v396, %v392
    %v429 = vpack.c.b16 %v397, %v393
    %v430 = vpack.c.b16 %v398, %v394
    %463 = vmatpush.bf16.msra.mxu0 %v427
    %464 = vmatpush.bf16.msra.mxu0 %v423
    %465 = vmatpush.bf16.msra.mxu0 %v419
    %466 = vmatpush.bf16.msra.mxu0 %v415
    %467 = vmatpush.bf16.msra.mxu0 %v411
    %468 = vmatpush.bf16.msra.mxu0 %v407
    %469 = vmatpush.bf16.msra.mxu0 %v403
    %470 = vmatpush.bf16.msra.mxu0 %v399
    %471 = vmatmul.bf16.gmra.mxu0 %v257
    %v472 = vpop.f32.mrf.mxu0
    %v473 = vadd.f32 %v295, %v472
    %v474 = vpop.f32.mrf.mxu0
    %v475 = vadd.f32 %v295, %v474
    %476 = vmatmul.bf16.gmra.mxu0 %v258
    %v477 = vpop.f32.mrf.mxu0
    %v478 = vadd.f32 %v295, %v477
    %v479 = vpop.f32.mrf.mxu0
    %v480 = vadd.f32 %v295, %v479
    %481 = vmatmul.bf16.gmra.mxu0 %v259
    %v482 = vpop.f32.mrf.mxu0
    %v483 = vadd.f32 %v295, %v482
    %v484 = vpop.f32.mrf.mxu0
    %v485 = vadd.f32 %v295, %v484
    %486 = vmatmul.bf16.gmra.mxu0 %v260
    %v487 = vpop.f32.mrf.mxu0
    %v488 = vadd.f32 %v295, %v487
    %v489 = vpop.f32.mrf.mxu0
    %v490 = vadd.f32 %v295, %v489
    %491 = vdwg.mxu0
    %492 = vmatpush.bf16.msra.mxu0 %v428
    %493 = vmatpush.bf16.msra.mxu0 %v424
    %494 = vmatpush.bf16.msra.mxu0 %v420
    %495 = vmatpush.bf16.msra.mxu0 %v416
    %496 = vmatpush.bf16.msra.mxu0 %v412
    %497 = vmatpush.bf16.msra.mxu0 %v408
    %498 = vmatpush.bf16.msra.mxu0 %v404
    %499 = vmatpush.bf16.msra.mxu0 %v400
    %500 = vmatmul.bf16.gmra.mxu0 %v257
    %v501 = vpop.f32.mrf.mxu0
    %v502 = vadd.f32 %v296, %v501
    %v503 = vpop.f32.mrf.mxu0
    %v504 = vadd.f32 %v296, %v503
    %505 = vmatmul.bf16.gmra.mxu0 %v258
    %v506 = vpop.f32.mrf.mxu0
    %v507 = vadd.f32 %v296, %v506
    %v508 = vpop.f32.mrf.mxu0
    %v509 = vadd.f32 %v296, %v508
    %510 = vmatmul.bf16.gmra.mxu0 %v259
    %v511 = vpop.f32.mrf.mxu0
    %v512 = vadd.f32 %v296, %v511
    %v513 = vpop.f32.mrf.mxu0
    %v514 = vadd.f32 %v296, %v513
    %515 = vmatmul.bf16.gmra.mxu0 %v260
    %v516 = vpop.f32.mrf.mxu0
    %v517 = vadd.f32 %v296, %v516
    %v518 = vpop.f32.mrf.mxu0
    %v519 = vadd.f32 %v296, %v518
    %520 = vdwg.mxu0
    %521 = vmatpush.bf16.msra.mxu0 %v429
    %522 = vmatpush.bf16.msra.mxu0 %v425
    %523 = vmatpush.bf16.msra.mxu0 %v421
    %524 = vmatpush.bf16.msra.mxu0 %v417
    %525 = vmatpush.bf16.msra.mxu0 %v413
    %526 = vmatpush.bf16.msra.mxu0 %v409
    %527 = vmatpush.bf16.msra.mxu0 %v405
    %528 = vmatpush.bf16.msra.mxu0 %v401
    %529 = vmatmul.bf16.gmra.mxu0 %v257
    %v530 = vpop.f32.mrf.mxu0
    %v531 = vadd.f32 %v297, %v530
    %v532 = vpop.f32.mrf.mxu0
    %v533 = vadd.f32 %v297, %v532
    %534 = vmatmul.bf16.gmra.mxu0 %v258
    %v535 = vpop.f32.mrf.mxu0
    %v536 = vadd.f32 %v297, %v535
    %v537 = vpop.f32.mrf.mxu0
    %v538 = vadd.f32 %v297, %v537
    %539 = vmatmul.bf16.gmra.mxu0 %v259
    %v540 = vpop.f32.mrf.mxu0
    %v541 = vadd.f32 %v297, %v540
    %v542 = vpop.f32.mrf.mxu0
    %v543 = vadd.f32 %v297, %v542
    %544 = vmatmul.bf16.gmra.mxu0 %v260
    %v545 = vpop.f32.mrf.mxu0
    %v546 = vadd.f32 %v297, %v545
    %v547 = vpop.f32.mrf.mxu0
    %v548 = vadd.f32 %v297, %v547
    %549 = vdwg.mxu0
    %550 = vmatpush.bf16.msra.mxu0 %v430
    %551 = vmatpush.bf16.msra.mxu0 %v426
    %552 = vmatpush.bf16.msra.mxu0 %v422
    %553 = vmatpush.bf16.msra.mxu0 %v418
    %554 = vmatpush.bf16.msra.mxu0 %v414
    %555 = vmatpush.bf16.msra.mxu0 %v410
    %556 = vmatpush.bf16.msra.mxu0 %v406
    %557 = vmatpush.bf16.msra.mxu0 %v402
    %558 = vmatmul.bf16.gmra.mxu0 %v257
    %v559 = vpop.f32.mrf.mxu0
    %v560 = vadd.f32 %v298, %v559
    %v561 = vpop.f32.mrf.mxu0
    %v562 = vadd.f32 %v298, %v561
    %563 = vmatmul.bf16.gmra.mxu0 %v258
    %v564 = vpop.f32.mrf.mxu0
    %v565 = vadd.f32 %v298, %v564
    %v566 = vpop.f32.mrf.mxu0
    %v567 = vadd.f32 %v298, %v566
    %568 = vmatmul.bf16.gmra.mxu0 %v259
    %v569 = vpop.f32.mrf.mxu0
    %v570 = vadd.f32 %v298, %v569
    %v571 = vpop.f32.mrf.mxu0
    %v572 = vadd.f32 %v298, %v571
    %573 = vmatmul.bf16.gmra.mxu0 %v260
    %v574 = vpop.f32.mrf.mxu0
    %v575 = vadd.f32 %v298, %v574
    %v576 = vpop.f32.mrf.mxu0
    %v577 = vadd.f32 %v298, %v576
    %578 = vdwg.mxu0
    %v579 = vmax.f32 %v473, 0.0
    %v580 = vmax.f32 %v502, 0.0
    %v581 = vmax.f32 %v531, 0.0
    %v582 = vmax.f32 %v560, 0.0
    %v583 = vmax.f32 %v475, 0.0
    %v584 = vmax.f32 %v504, 0.0
    %v585 = vmax.f32 %v533, 0.0
    %v586 = vmax.f32 %v562, 0.0
    %v587 = vmax.f32 %v478, 0.0
    %v588 = vmax.f32 %v507, 0.0
    %v589 = vmax.f32 %v536, 0.0
    %v590 = vmax.f32 %v565, 0.0
    %v591 = vmax.f32 %v480, 0.0
    %v592 = vmax.f32 %v509, 0.0
    %v593 = vmax.f32 %v538, 0.0
    %v594 = vmax.f32 %v567, 0.0
    %v595 = vmax.f32 %v483, 0.0
    %v596 = vmax.f32 %v512, 0.0
    %v597 = vmax.f32 %v541, 0.0
    %v598 = vmax.f32 %v570, 0.0
    %v599 = vmax.f32 %v485, 0.0
    %v600 = vmax.f32 %v514, 0.0
    %v601 = vmax.f32 %v543, 0.0
    %v602 = vmax.f32 %v572, 0.0
    %v603 = vmax.f32 %v488, 0.0
    %v604 = vmax.f32 %v517, 0.0
    %v605 = vmax.f32 %v546, 0.0
    %v606 = vmax.f32 %v575, 0.0
    %v607 = vmax.f32 %v490, 0.0
    %v608 = vmax.f32 %v519, 0.0
    %v609 = vmax.f32 %v548, 0.0
    %v610 = vmax.f32 %v577, 0.0
    %v611 = vpack.c.bf16 %v583, %v579
    %v612 = vpack.c.bf16 %v584, %v580
    %v613 = vpack.c.bf16 %v585, %v581
    %v614 = vpack.c.bf16 %v586, %v582
    %v615 = vpack.c.bf16 %v591, %v587
    %v616 = vpack.c.bf16 %v592, %v588
    %v617 = vpack.c.bf16 %v593, %v589
    %v618 = vpack.c.bf16 %v594, %v590
    %v619 = vpack.c.bf16 %v599, %v595
    %v620 = vpack.c.bf16 %v600, %v596
    %v621 = vpack.c.bf16 %v601, %v597
    %v622 = vpack.c.bf16 %v602, %v598
    %v623 = vpack.c.bf16 %v607, %v603
    %v624 = vpack.c.bf16 %v608, %v604
    %v625 = vpack.c.bf16 %v609, %v605
    %v626 = vpack.c.bf16 %v610, %v606
    %v627 = vld [vmem:[#allocation8] sm:$0xf]
    %v628 = vld [vmem:[#allocation8 + $0x4] sm:$0xf]
    %v629 = vld [vmem:[#allocation8 + $0x8] sm:$0xf]
    %v630 = vld [vmem:[#allocation8 + $0xc] sm:$0xf]
    %v631 = vld [vmem:[#allocation8 + $0x10] sm:$0xf]
    %v632 = vld [vmem:[#allocation8 + $0x14] sm:$0xf]
    %v633 = vld [vmem:[#allocation8 + $0x18] sm:$0xf]
    %v634 = vld [vmem:[#allocation8 + $0x1c] sm:$0xf]
    %v635 = vld [vmem:[#allocation8 + $0x20] sm:$0xf]
    %v636 = vld [vmem:[#allocation8 + $0x24] sm:$0xf]
    %v637 = vld [vmem:[#allocation8 + $0x28] sm:$0xf]
    %v638 = vld [vmem:[#allocation8 + $0x2c] sm:$0xf]
    %v639 = vld [vmem:[#allocation8 + $0x30] sm:$0xf]
    %v640 = vld [vmem:[#allocation8 + $0x34] sm:$0xf]
    %v641 = vld [vmem:[#allocation8 + $0x38] sm:$0xf]
    %v642 = vld [vmem:[#allocation8 + $0x3c] sm:$0xf]
    %v643 = vld [vmem:[#allocation8 + $0x40] sm:$0xf]
    %v644 = vld [vmem:[#allocation8 + $0x44] sm:$0xf]
    %v645 = vld [vmem:[#allocation8 + $0x48] sm:$0xf]
    %v646 = vld [vmem:[#allocation8 + $0x4c] sm:$0xf]
    %v647 = vld [vmem:[#allocation8 + $0x50] sm:$0xf]
    %v648 = vld [vmem:[#allocation8 + $0x54] sm:$0xf]
    %v649 = vld [vmem:[#allocation8 + $0x58] sm:$0xf]
    %v650 = vld [vmem:[#allocation8 + $0x5c] sm:$0xf]
    %v651 = vld [vmem:[#allocation8 + $0x60] sm:$0xf]
    %v652 = vld [vmem:[#allocation8 + $0x64] sm:$0xf]
    %v653 = vld [vmem:[#allocation8 + $0x68] sm:$0xf]
    %v654 = vld [vmem:[#allocation8 + $0x6c] sm:$0xf]
    %v655 = vld [vmem:[#allocation8 + $0x70] sm:$0xf]
    %v656 = vld [vmem:[#allocation8 + $0x74] sm:$0xf]
    %v657 = vld [vmem:[#allocation8 + $0x78] sm:$0xf]
    %v658 = vld [vmem:[#allocation8 + $0x7c] sm:$0xf]
    %v659 = vld [vmem:[#allocation8 + $0x80] sm:$0xf]
    %v660 = vld [vmem:[#allocation8 + $0x84] sm:$0xf]
    %v661 = vld [vmem:[#allocation8 + $0x88] sm:$0xf]
    %v662 = vld [vmem:[#allocation8 + $0x8c] sm:$0xf]
    %v663 = vld [vmem:[#allocation8 + $0x90] sm:$0xf]
    %v664 = vld [vmem:[#allocation8 + $0x94] sm:$0xf]
    %v665 = vld [vmem:[#allocation8 + $0x98] sm:$0xf]
    %v666 = vld [vmem:[#allocation8 + $0x9c] sm:$0xf]
    %v667 = vld [vmem:[#allocation8 + $0xa0] sm:$0xf]
    %v668 = vld [vmem:[#allocation8 + $0xa4] sm:$0xf]
    %v669 = vld [vmem:[#allocation8 + $0xa8] sm:$0xf]
    %v670 = vld [vmem:[#allocation8 + $0xac] sm:$0xf]
    %v671 = vld [vmem:[#allocation8 + $0xb0] sm:$0xf]
    %v672 = vld [vmem:[#allocation8 + $0xb4] sm:$0xf]
    %v673 = vld [vmem:[#allocation8 + $0xb8] sm:$0xf]
    %v674 = vld [vmem:[#allocation8 + $0xbc] sm:$0xf]
    %v675 = vld [vmem:[#allocation8 + $0xc0] sm:$0xf]
    %v676 = vld [vmem:[#allocation8 + $0xc4] sm:$0xf]
    %v677 = vld [vmem:[#allocation8 + $0xc8] sm:$0xf]
    %v678 = vld [vmem:[#allocation8 + $0xcc] sm:$0xf]
    %v679 = vld [vmem:[#allocation8 + $0xd0] sm:$0xf]
    %v680 = vld [vmem:[#allocation8 + $0xd4] sm:$0xf]
    %v681 = vld [vmem:[#allocation8 + $0xd8] sm:$0xf]
    %v682 = vld [vmem:[#allocation8 + $0xdc] sm:$0xf]
    %v683 = vld [vmem:[#allocation8 + $0xe0] sm:$0xf]
    %v684 = vld [vmem:[#allocation8 + $0xe4] sm:$0xf]
    %v685 = vld [vmem:[#allocation8 + $0xe8] sm:$0xf]
    %v686 = vld [vmem:[#allocation8 + $0xec] sm:$0xf]
    %v687 = vld [vmem:[#allocation8 + $0xf0] sm:$0xf]
    %v688 = vld [vmem:[#allocation8 + $0xf4] sm:$0xf]
    %v689 = vld [vmem:[#allocation8 + $0xf8] sm:$0xf]
    %v690 = vld [vmem:[#allocation8 + $0xfc] sm:$0xf]
    %v691 = vld [vmem:[%s4] sm:$0x1]
    %v693 = vperm.slane %v691, 0
    %v759 = vunpack.c.l.b16 %v627
    %v760 = vunpack.c.l.b16 %v628
    %v761 = vunpack.c.l.b16 %v629
    %v762 = vunpack.c.l.b16 %v630
    %v763 = vunpack.c.l.b16 %v631
    %v764 = vunpack.c.l.b16 %v632
    %v765 = vunpack.c.l.b16 %v633
    %v766 = vunpack.c.l.b16 %v634
    %v767 = vunpack.c.l.b16 %v635
    %v768 = vunpack.c.l.b16 %v636
    %v769 = vunpack.c.l.b16 %v637
    %v770 = vunpack.c.l.b16 %v638
    %v771 = vunpack.c.l.b16 %v639
    %v772 = vunpack.c.l.b16 %v640
    %v773 = vunpack.c.l.b16 %v641
    %v774 = vunpack.c.l.b16 %v642
    %v775 = vunpack.c.l.b16 %v643
    %v776 = vunpack.c.l.b16 %v644
    %v777 = vunpack.c.l.b16 %v645
    %v778 = vunpack.c.l.b16 %v646
    %v779 = vunpack.c.l.b16 %v647
    %v780 = vunpack.c.l.b16 %v648
    %v781 = vunpack.c.l.b16 %v649
    %v782 = vunpack.c.l.b16 %v650
    %v783 = vunpack.c.l.b16 %v651
    %v784 = vunpack.c.l.b16 %v652
    %v785 = vunpack.c.l.b16 %v653
    %v786 = vunpack.c.l.b16 %v654
    %v787 = vunpack.c.l.b16 %v655
    %v788 = vunpack.c.l.b16 %v656
    %v789 = vunpack.c.l.b16 %v657
    %v790 = vunpack.c.l.b16 %v658
    %v791 = vunpack.c.l.b16 %v659
    %v792 = vunpack.c.l.b16 %v660
    %v793 = vunpack.c.l.b16 %v661
    %v794 = vunpack.c.l.b16 %v662
    %v795 = vunpack.c.l.b16 %v663
    %v796 = vunpack.c.l.b16 %v664
    %v797 = vunpack.c.l.b16 %v665
    %v798 = vunpack.c.l.b16 %v666
    %v799 = vunpack.c.l.b16 %v667
    %v800 = vunpack.c.l.b16 %v668
    %v801 = vunpack.c.l.b16 %v669
    %v802 = vunpack.c.l.b16 %v670
    %v803 = vunpack.c.l.b16 %v671
    %v804 = vunpack.c.l.b16 %v672
    %v805 = vunpack.c.l.b16 %v673
    %v806 = vunpack.c.l.b16 %v674
    %v807 = vunpack.c.l.b16 %v675
    %v808 = vunpack.c.l.b16 %v676
    %v809 = vunpack.c.l.b16 %v677
    %v810 = vunpack.c.l.b16 %v678
    %v811 = vunpack.c.l.b16 %v679
    %v812 = vunpack.c.l.b16 %v680
    %v813 = vunpack.c.l.b16 %v681
    %v814 = vunpack.c.l.b16 %v682
    %v815 = vunpack.c.l.b16 %v683
    %v816 = vunpack.c.l.b16 %v684
    %v817 = vunpack.c.l.b16 %v685
    %v818 = vunpack.c.l.b16 %v686
    %v819 = vunpack.c.l.b16 %v687
    %v820 = vunpack.c.l.b16 %v688
    %v821 = vunpack.c.l.b16 %v689
    %v822 = vunpack.c.l.b16 %v690
    %v823 = vpack.c.b16 %v760, %v759
    %v824 = vpack.c.b16 %v762, %v761
    %v825 = vpack.c.b16 %v764, %v763
    %v826 = vpack.c.b16 %v766, %v765
    %v827 = vpack.c.b16 %v768, %v767
    %v828 = vpack.c.b16 %v770, %v769
    %v829 = vpack.c.b16 %v772, %v771
    %v830 = vpack.c.b16 %v774, %v773
    %v831 = vpack.c.b16 %v776, %v775
    %v832 = vpack.c.b16 %v778, %v777
    %v833 = vpack.c.b16 %v780, %v779
    %v834 = vpack.c.b16 %v782, %v781
    %v835 = vpack.c.b16 %v784, %v783
    %v836 = vpack.c.b16 %v786, %v785
    %v837 = vpack.c.b16 %v788, %v787
    %v838 = vpack.c.b16 %v790, %v789
    %v839 = vpack.c.b16 %v792, %v791
    %v840 = vpack.c.b16 %v794, %v793
    %v841 = vpack.c.b16 %v796, %v795
    %v842 = vpack.c.b16 %v798, %v797
    %v843 = vpack.c.b16 %v800, %v799
    %v844 = vpack.c.b16 %v802, %v801
    %v845 = vpack.c.b16 %v804, %v803
    %v846 = vpack.c.b16 %v806, %v805
    %v847 = vpack.c.b16 %v808, %v807
    %v848 = vpack.c.b16 %v810, %v809
    %v849 = vpack.c.b16 %v812, %v811
    %v850 = vpack.c.b16 %v814, %v813
    %v851 = vpack.c.b16 %v816, %v815
    %v852 = vpack.c.b16 %v818, %v817
    %v853 = vpack.c.b16 %v820, %v819
    %v854 = vpack.c.b16 %v822, %v821
    %887 = vmatpush.bf16.msra.mxu0 %v830
    %888 = vmatpush.bf16.msra.mxu0 %v829
    %889 = vmatpush.bf16.msra.mxu0 %v828
    %890 = vmatpush.bf16.msra.mxu0 %v827
    %891 = vmatpush.bf16.msra.mxu0 %v826
    %892 = vmatpush.bf16.msra.mxu0 %v825
    %893 = vmatpush.bf16.msra.mxu0 %v824
    %894 = vmatpush.bf16.msra.mxu0 %v823
    %895 = vmatmul.bf16.gmra.mxu0 %v611
    %v896 = vpop.f32.mrf.mxu0
    %v897 = vadd.f32 %v693, %v896
    %v898 = vpop.f32.mrf.mxu0
    %v899 = vadd.f32 %v693, %v898
    %900 = vmatmul.bf16.gmra.mxu0 %v615
    %v901 = vpop.f32.mrf.mxu0
    %v902 = vadd.f32 %v693, %v901
    %v903 = vpop.f32.mrf.mxu0
    %v904 = vadd.f32 %v693, %v903
    %905 = vmatmul.bf16.gmra.mxu0 %v619
    %v906 = vpop.f32.mrf.mxu0
    %v907 = vadd.f32 %v693, %v906
    %v908 = vpop.f32.mrf.mxu0
    %v909 = vadd.f32 %v693, %v908
    %910 = vmatmul.bf16.gmra.mxu0 %v623
    %v911 = vpop.f32.mrf.mxu0
    %v912 = vadd.f32 %v693, %v911
    %v913 = vpop.f32.mrf.mxu0
    %v914 = vadd.f32 %v693, %v913
    %915 = vdwg.mxu0
    %916 = vmatpush.bf16.msra.mxu0 %v838
    %917 = vmatpush.bf16.msra.mxu0 %v837
    %918 = vmatpush.bf16.msra.mxu0 %v836
    %919 = vmatpush.bf16.msra.mxu0 %v835
    %920 = vmatpush.bf16.msra.mxu0 %v834
    %921 = vmatpush.bf16.msra.mxu0 %v833
    %922 = vmatpush.bf16.msra.mxu0 %v832
    %923 = vmatpush.bf16.msra.mxu0 %v831
    %924 = vmatmul.bf16.gmra.mxu0 %v612
    %v925 = vpop.f32.mrf.mxu0
    %v926 = vadd.f32 %v897, %v925
    %v927 = vpop.f32.mrf.mxu0
    %v928 = vadd.f32 %v899, %v927
    %929 = vmatmul.bf16.gmra.mxu0 %v616
    %v930 = vpop.f32.mrf.mxu0
    %v931 = vadd.f32 %v902, %v930
    %v932 = vpop.f32.mrf.mxu0
    %v933 = vadd.f32 %v904, %v932
    %934 = vmatmul.bf16.gmra.mxu0 %v620
    %v935 = vpop.f32.mrf.mxu0
    %v936 = vadd.f32 %v907, %v935
    %v937 = vpop.f32.mrf.mxu0
    %v938 = vadd.f32 %v909, %v937
    %939 = vmatmul.bf16.gmra.mxu0 %v624
    %v940 = vpop.f32.mrf.mxu0
    %v941 = vadd.f32 %v912, %v940
    %v942 = vpop.f32.mrf.mxu0
    %v943 = vadd.f32 %v914, %v942
    %944 = vdwg.mxu0
    %945 = vmatpush.bf16.msra.mxu0 %v846
    %946 = vmatpush.bf16.msra.mxu0 %v845
    %947 = vmatpush.bf16.msra.mxu0 %v844
    %948 = vmatpush.bf16.msra.mxu0 %v843
    %949 = vmatpush.bf16.msra.mxu0 %v842
    %950 = vmatpush.bf16.msra.mxu0 %v841
    %951 = vmatpush.bf16.msra.mxu0 %v840
    %952 = vmatpush.bf16.msra.mxu0 %v839
    %953 = vmatmul.bf16.gmra.mxu0 %v613
    %v954 = vpop.f32.mrf.mxu0
    %v955 = vadd.f32 %v926, %v954
    %v956 = vpop.f32.mrf.mxu0
    %v957 = vadd.f32 %v928, %v956
    %958 = vmatmul.bf16.gmra.mxu0 %v617
    %v959 = vpop.f32.mrf.mxu0
    %v960 = vadd.f32 %v931, %v959
    %v961 = vpop.f32.mrf.mxu0
    %v962 = vadd.f32 %v933, %v961
    %963 = vmatmul.bf16.gmra.mxu0 %v621
    %v964 = vpop.f32.mrf.mxu0
    %v965 = vadd.f32 %v936, %v964
    %v966 = vpop.f32.mrf.mxu0
    %v967 = vadd.f32 %v938, %v966
    %968 = vmatmul.bf16.gmra.mxu0 %v625
    %v969 = vpop.f32.mrf.mxu0
    %v970 = vadd.f32 %v941, %v969
    %v971 = vpop.f32.mrf.mxu0
    %v972 = vadd.f32 %v943, %v971
    %973 = vdwg.mxu0
    %974 = vmatpush.bf16.msra.mxu0 %v854
    %975 = vmatpush.bf16.msra.mxu0 %v853
    %976 = vmatpush.bf16.msra.mxu0 %v852
    %977 = vmatpush.bf16.msra.mxu0 %v851
    %978 = vmatpush.bf16.msra.mxu0 %v850
    %979 = vmatpush.bf16.msra.mxu0 %v849
    %980 = vmatpush.bf16.msra.mxu0 %v848
    %981 = vmatpush.bf16.msra.mxu0 %v847
    %982 = vmatmul.bf16.gmra.mxu0 %v614
    %v983 = vpop.f32.mrf.mxu0
    %v984 = vadd.f32 %v955, %v983
    %v985 = vpop.f32.mrf.mxu0
    %v986 = vadd.f32 %v957, %v985
    %987 = vmatmul.bf16.gmra.mxu0 %v618
    %v988 = vpop.f32.mrf.mxu0
    %v989 = vadd.f32 %v960, %v988
    %v990 = vpop.f32.mrf.mxu0
    %v991 = vadd.f32 %v962, %v990
    %992 = vmatmul.bf16.gmra.mxu0 %v622
    %v993 = vpop.f32.mrf.mxu0
    %v994 = vadd.f32 %v965, %v993
    %v995 = vpop.f32.mrf.mxu0
    %v996 = vadd.f32 %v967, %v995
    %997 = vmatmul.bf16.gmra.mxu0 %v626
    %v998 = vpop.f32.mrf.mxu0
    %v999 = vadd.f32 %v970, %v998
    %v1000 = vpop.f32.mrf.mxu0
    %v1001 = vadd.f32 %v972, %v1000
    %1002 = vdwg.mxu0
    %1003 = vst [vmem:[#allocation10] sm:$0xff] %v984
    %1004 = vst [vmem:[#allocation10 + $0x8] sm:$0xff] %v986
    %1005 = vst [vmem:[#allocation10 + $0x10] sm:$0xff] %v989
    %1006 = vst [vmem:[#allocation10 + $0x18] sm:$0xff] %v991
    %1007 = vst [vmem:[#allocation10 + $0x20] sm:$0xff] %v994
    %1008 = vst [vmem:[#allocation10 + $0x28] sm:$0xff] %v996
    %1009 = vst [vmem:[#allocation10 + $0x30] sm:$0xff] %v999
    %1010 = vst [vmem:[#allocation10 + $0x38] sm:$0xff] %v1001
    // Predicated region
    $region38: #{tpu_custom_call.1} parent=1 // pred_check
      _
    $region39: #{tpu_custom_call.1} parent=1 // pred_check_branch
      %1012 = sbr.rel (0) target = $region41
    $region40: #{tpu_custom_call.1} parent=1 // pred_region
      %1014 = vsyncadd [#allocation4], 0
      %s1015 = sshll.u32 [#allocation10], 4
      %s1016 = int_to_ptr.vmem [resolvable:$true] %s1015
      %s1017 = sshll.u32 %s5, 4
      %s1018 = int_to_ptr.hbm [resolvable:$true] %s1017
      %1023 = dma.vmem_to_hbm [thread:$0]  %s1016, 1024, %s1018, [#allocation4], 128, 128, 8
    $region41: #{tpu_custom_call.1} parent=1 // pred_fallthru
      _
    // Predicated region
    $region42: #{tpu_custom_call.1} parent=1 // pred_check
      _
    $region43: #{tpu_custom_call.1} parent=1 // pred_check_branch
      %1025 = sbr.rel (0) target = $region45
    $region44: #{tpu_custom_call.1} parent=1 // pred_region
      %1027 = dma.done [#allocation4], 1024
    $region45: #{tpu_custom_call.1} parent=1 // pred_fallthru
      _
    %1028 = vsyncpa [#allocation3], 1
    %1029 = vsyncpa [#allocation6], 1
    %1030 = vsyncpa [#allocation9], 1
    %1031 = vsyncpa [#allocation4], 1

</llo_original>
